<compile_context>
chip_gen: v7x
topology: tpu7x:2x2x1
jax: 0.10.0
libtpu: 0.0.40
codegen_flags: <defaults>
</compile_context>

<pallas_src>
import functools

import jax
import jax.numpy as jnp
from jax.experimental import pallas as pl
from jax.experimental.pallas import tpu as pltpu


def _ceil_to(x, m):
    return ((x + m - 1) // m) * m


# ------------------------------ Pallas kernels ------------------------------

def _mm_bias_stats_kernel(a_ref, w_ref, b_ref, odd_ref, sum_ref, sq_ref):
    """One lane-tile of the channels-first K-folded transposed-conv matmul,
    fused with bias add and per-(sample, channel) sum / sum-of-squares.

    a_ref  : (1, K, TS)    bf16 im2col columns of sample n (K = 8 * Cin)
    w_ref  : (Cout, K)     bf16 weight matrix (tap-major columns)
    b_ref  : (Cout, 1)     f32 bias
    odd_ref: (1, Cout, TS) f32 = raw + bias (odd output voxels, lane-dense)
    sum_ref, sq_ref: (1, Cout, 1) f32, accumulated across grid axis 1
        ('arbitrary'); zero-padded columns of A contribute exactly 0.
    """
    @pl.when(pl.program_id(1) == 0)
    def _():
        sum_ref[...] = jnp.zeros_like(sum_ref)
        sq_ref[...] = jnp.zeros_like(sq_ref)

    raw = jnp.dot(w_ref[...], a_ref[0], preferred_element_type=jnp.float32)
    odd_ref[0] = raw + b_ref[...]
    sum_ref[0] += jnp.sum(raw, axis=1, keepdims=True)
    sq_ref[0] += jnp.sum(raw * raw, axis=1, keepdims=True)


def _fused_matmul_stats(a, wm, b2, *, ts):
    N, K, Sp = a.shape
    Cout = wm.shape[0]
    return pl.pallas_call(
        _mm_bias_stats_kernel,
        out_shape=(jax.ShapeDtypeStruct((N, Cout, Sp), jnp.float32),
                   jax.ShapeDtypeStruct((N, Cout, 1), jnp.float32),
                   jax.ShapeDtypeStruct((N, Cout, 1), jnp.float32)),
        grid=(N, Sp // ts),
        in_specs=[pl.BlockSpec((1, K, ts), lambda n, i: (n, 0, i)),
                  pl.BlockSpec((Cout, K), lambda n, i: (0, 0)),
                  pl.BlockSpec((Cout, 1), lambda n, i: (0, 0))],
        out_specs=(pl.BlockSpec((1, Cout, ts), lambda n, i: (n, 0, i)),
                   pl.BlockSpec((1, Cout, 1), lambda n, i: (n, 0, 0)),
                   pl.BlockSpec((1, Cout, 1), lambda n, i: (n, 0, 0))),
        compiler_params=pltpu.CompilerParams(
            dimension_semantics=("parallel", "arbitrary")),
    )(a, wm, b2)


def _norm_act_kernel(x_ref, m_ref, r_ref, o_ref, *, slope):
    y = (x_ref[0] - m_ref[0]) * r_ref[0]
    o_ref[0] = jnp.where(y >= 0, y, slope * y)


def _norm_act(x, mean, rstd, *, ts, slope):
    """(x - mean) * rstd then LeakyReLU.  x: (N, Cout, Sp); mean/rstd: (N, Cout, 1).
    Channels-first layout keeps the big spatial axis on the lanes, so every
    load/store is a full vreg."""
    N, Cout, Sp = x.shape
    return pl.pallas_call(
        functools.partial(_norm_act_kernel, slope=slope),
        out_shape=jax.ShapeDtypeStruct((N, Cout, Sp), jnp.float32),
        grid=(N, Sp // ts),
        in_specs=[pl.BlockSpec((1, Cout, ts), lambda n, i: (n, 0, i)),
                  pl.BlockSpec((1, Cout, 1), lambda n, i: (n, 0, 0)),
                  pl.BlockSpec((1, Cout, 1), lambda n, i: (n, 0, 0))],
        out_specs=pl.BlockSpec((1, Cout, ts), lambda n, i: (n, 0, i)),
        compiler_params=pltpu.CompilerParams(
            dimension_semantics=("parallel", "parallel")),
    )(x, mean, rstd)


# ------------------------------ forward pass --------------------------------

def up_conv_forward(x, w, b, *, eps=1e-5, slope=0.01):
    """up_conv forward.

    x: (N, Cin, D, H, W) float32  (NCDHW, PyTorch layout)
    w: (Cin, Cout, 2, 2, 2)       (PyTorch ConvTranspose3d weight layout)
    b: (Cout,)
    returns: (N, Cout, 2D, 2H, 2W) float32
    """
    N, Cin, D, H, W = x.shape
    Cout = w.shape[1]
    S = D * H * W
    ts = min(2048, _ceil_to(S, 128))        # lane tile (multiple of 128)
    Sp = _ceil_to(S, ts)

    # ---- im2col, channels-first: 8 taps folded into the contraction dim ----
    # TODO(synk): the tap slicing/concat is XLA glue; an in-kernel halo'd shift
    # (shifts are +1/+W/+HW in the flattened S axis) would avoid materializing
    # the 8x im2col matrix in HBM.
    xe = jnp.pad(x, ((0, 0), (0, 0), (0, 1), (0, 1), (0, 1)))   # far-edge pad
    taps = []
    for kd in range(2):
        for kh in range(2):
            for kw in range(2):
                taps.append(xe[:, :, 1 - kd:1 - kd + D,
                               1 - kh:1 - kh + H,
                               1 - kw:1 - kw + W])
    a = jnp.concatenate(taps, axis=1).reshape(N, 8 * Cin, S)
    a = jnp.pad(a, ((0, 0), (0, 0), (0, Sp - S))).astype(jnp.bfloat16)

    # weight matrix: columns tap-major to match the im2col channel order
    wm = jnp.transpose(w, (1, 2, 3, 4, 0)).reshape(Cout, 8 * Cin)
    wm = wm.astype(jnp.bfloat16)
    b2 = b.astype(jnp.float32).reshape(Cout, 1)

    # ---- fused matmul + bias + per-(n, c) sum / sumsq of the odd voxels ----
    odd_b, sum_raw, sq_raw = _fused_matmul_stats(a, wm, b2, ts=ts)

    # ---- InstanceNorm stats; the 7/8 bias-only voxels are added analytically
    bb = b2.reshape(1, Cout, 1)
    total = 8.0 * S
    mean = (sum_raw + total * bb) / total
    ex2 = (sq_raw + 2.0 * bb * sum_raw + total * bb * bb) / total
    var = jnp.maximum(ex2 - mean * mean, 0.0)
    rstd = jax.lax.rsqrt(var + eps)

    # ---- normalize + LeakyReLU the odd voxels (lane-dense Pallas pass) ----
    y_odd = _norm_act(odd_b, mean, rstd, ts=ts, slope=slope)    # (N, Cout, Sp)

    # bias-only voxels normalize to a per-(n, c) constant
    ev = (bb - mean) * rstd
    ev = jnp.where(ev >= 0, ev, slope * ev)                     # (N, Cout, 1)

    # ---- interleave into NCDHW output (already channels-first, no transpose)
    # TODO(synk): a Pallas kernel with multi-dim strided stores could write the
    # interleaved output directly; left as XLA glue (static update slice of a
    # broadcast) inside the jit here.
    y5 = y_odd[:, :, :S].reshape(N, Cout, D, H, W)
    full = jnp.broadcast_to(ev.reshape(N, Cout, 1, 1, 1, 1, 1, 1),
                            (N, Cout, D, 2, H, 2, W, 2))
    full = full.at[:, :, :, 1, :, 1, :, 1].set(y5)
    return full.reshape(N, Cout, 2 * D, 2 * H, 2 * W)


# ------------------------------ pure-JAX reference --------------------------

def up_conv_reference(x, w, b, eps=1e-5, slope=0.01):
    N, Cin, D, H, W = x.shape
    Cout = w.shape[1]
    buf = jnp.zeros((N, Cout, 2 * D + 2, 2 * H + 2, 2 * W + 2), jnp.float32)
    for kd in range(2):
        for kh in range(2):
            for kw in range(2):
                contrib = jnp.einsum('nidhw,io->nodhw', x, w[:, :, kd, kh, kw],
                                     precision=jax.lax.Precision.HIGHEST)
                buf = buf.at[:, :, 2 * kd:2 * kd + 2 * D:2,
                             2 * kh:2 * kh + 2 * H:2,
                             2 * kw:2 * kw + 2 * W:2].add(contrib)
    y = (buf[:, :, 1:2 * D + 1, 1:2 * H + 1, 1:2 * W + 1]
         + b[None, :, None, None, None])
    mean = jnp.mean(y, axis=(2, 3, 4), keepdims=True)
    var = jnp.mean(jnp.square(y - mean), axis=(2, 3, 4), keepdims=True)
    yn = (y - mean) * jax.lax.rsqrt(var + eps)
    return jnp.where(yn >= 0, yn, slope * yn)


if __name__ == "__main__":
    key = jax.random.PRNGKey(0)
    kx, kw, kb = jax.random.split(key, 3)
    N, Cin, Cout, D, H, W = 2, 16, 16, 8, 8, 8
    x = jax.random.normal(kx, (N, Cin, D, H, W), jnp.float32)
    bound = 1.0 / (Cout * 2 ** 3) ** 0.5     # PyTorch ConvTranspose3d init range
    w = jax.random.uniform(kw, (Cin, Cout, 2, 2, 2), jnp.float32, -bound, bound)
    b = jax.random.uniform(kb, (Cout,), jnp.float32, -bound, bound)

    fwd = jax.jit(up_conv_forward)
    out = fwd(x, w, b)
    jax.block_until_ready(out)
    assert out.shape == (N, Cout, 2 * D, 2 * H, 2 * W), out.shape

    ref = up_conv_reference(x, w, b)
    err = float(jnp.max(jnp.abs(out - ref)))
    scale = float(jnp.max(jnp.abs(ref))) + 1.0
    assert err <= 1e-2 * scale, f"max abs err {err} vs scale {scale}"
    print("KERNEL_OK")
</pallas_src>

<mosaic_0001>
module attributes {stable_mosaic.version = 11 : i64} {
  func.func @_mm_bias_stats_kernel(%arg0: i32, %arg1: i32, %arg2: memref<1x128x512xbf16, #tpu.memory_space<vmem>>, %arg3: memref<16x128xbf16, #tpu.memory_space<vmem>>, %arg4: memref<16x1xf32, #tpu.memory_space<vmem>>, %arg5: memref<1x16x512xf32, #tpu.memory_space<vmem>>, %arg6: memref<1x16x1xf32, #tpu.memory_space<vmem>>, %arg7: memref<1x16x1xf32, #tpu.memory_space<vmem>>) attributes {dimension_semantics = [#tpu.dimension_semantics<parallel>, #tpu.dimension_semantics<arbitrary>], iteration_bounds = array<i64: 2, 1>, scalar_prefetch = 0 : i64, scratch_operands = 0 : i64, tpu.core_type = #tpu.core_type<tc>, window_params = [{transform_indices = @transform_0, window_bounds = array<i64: 1, 128, 512>}, {pipeline_mode = #tpu.pipeline_mode<synchronous>, transform_indices = @transform_1, window_bounds = array<i64: 16, 128>}, {pipeline_mode = #tpu.pipeline_mode<synchronous>, transform_indices = @transform_2, window_bounds = array<i64: 16, 1>}, {transform_indices = @transform_3, window_bounds = array<i64: 1, 16, 512>}, {transform_indices = @transform_4, window_bounds = array<i64: 1, 16, 1>}, {transform_indices = @transform_5, window_bounds = array<i64: 1, 16, 1>}]} {
    %c0_i32 = arith.constant 0 : i32
    %0 = arith.cmpi eq, %arg1, %c0_i32 : i32
    %1 = arith.extui %0 : i1 to i32
    %c0_i32_0 = arith.constant 0 : i32
    %2 = arith.cmpi ne, %1, %c0_i32_0 : i32
    scf.if %2 {
      %cst_24 = arith.constant 0.000000e+00 : f32
      %30 = vector.broadcast %cst_24 : f32 to vector<1x16x1xf32>
      %c0_25 = arith.constant 0 : index
      %c0_26 = arith.constant 0 : index
      %c0_27 = arith.constant 0 : index
      %31 = vector.load %arg6[%c0_25, %c0_26, %c0_27] : memref<1x16x1xf32, #tpu.memory_space<vmem>>, vector<1x16x1xf32>
      tpu.vector_store %arg6[%c0_25, %c0_26, %c0_27], %30 {strides = array<i32>} : memref<1x16x1xf32, #tpu.memory_space<vmem>>, vector<1x16x1xf32>,
      %cst_28 = arith.constant 0.000000e+00 : f32
      %32 = vector.broadcast %cst_28 : f32 to vector<1x16x1xf32>
      %c0_29 = arith.constant 0 : index
      %c0_30 = arith.constant 0 : index
      %c0_31 = arith.constant 0 : index
      %33 = vector.load %arg7[%c0_29, %c0_30, %c0_31] : memref<1x16x1xf32, #tpu.memory_space<vmem>>, vector<1x16x1xf32>
      tpu.vector_store %arg7[%c0_29, %c0_30, %c0_31], %32 {strides = array<i32>} : memref<1x16x1xf32, #tpu.memory_space<vmem>>, vector<1x16x1xf32>,
    } else {
    }
    %c0 = arith.constant 0 : index
    %c0_1 = arith.constant 0 : index
    %3 = vector.load %arg3[%c0, %c0_1] : memref<16x128xbf16, #tpu.memory_space<vmem>>, vector<16x128xbf16>
    %c0_2 = arith.constant 0 : index
    %c0_3 = arith.constant 0 : index
    %c0_4 = arith.constant 0 : index
    %4 = vector.load %arg2[%c0_2, %c0_3, %c0_4] : memref<1x128x512xbf16, #tpu.memory_space<vmem>>, vector<1x128x512xbf16>
    %5 = vector.shape_cast %4 : vector<1x128x512xbf16> to vector<128x512xbf16>
    %cst = arith.constant dense<0.000000e+00> : vector<16x512xf32>
    %6 = tpu.matmul %3, %5, %cst {dimension_numbers = #tpu.dot_dimension_numbers<[1], [0], [0], [1], [0, 0, 1, 1], [], []>} : vector<16x128xbf16>, vector<128x512xbf16>, vector<16x512xf32> -> vector<16x512xf32>
    %c0_5 = arith.constant 0 : index
    %c0_6 = arith.constant 0 : index
    %7 = vector.load %arg4[%c0_5, %c0_6] : memref<16x1xf32, #tpu.memory_space<vmem>>, vector<16x1xf32>
    %8 = vector.broadcast %7 : vector<16x1xf32> to vector<16x512xf32>
    %9 = arith.addf %6, %8 : vector<16x512xf32>
    %c0_7 = arith.constant 0 : index
    %c0_8 = arith.constant 0 : index
    %c0_9 = arith.constant 0 : index
    %10 = vector.load %arg5[%c0_7, %c0_8, %c0_9] : memref<1x16x512xf32, #tpu.memory_space<vmem>>, vector<1x16x512xf32>
    %11 = vector.shape_cast %10 : vector<1x16x512xf32> to vector<16x512xf32>
    %12 = vector.shape_cast %9 : vector<16x512xf32> to vector<1x16x512xf32>
    tpu.vector_store %arg5[%c0_7, %c0_8, %c0_9], %12 {strides = array<i32>} : memref<1x16x512xf32, #tpu.memory_space<vmem>>, vector<1x16x512xf32>,
    %c0_10 = arith.constant 0 : index
    %c0_11 = arith.constant 0 : index
    %c0_12 = arith.constant 0 : index
    %13 = vector.load %arg6[%c0_10, %c0_11, %c0_12] : memref<1x16x1xf32, #tpu.memory_space<vmem>>, vector<1x16x1xf32>
    %14 = vector.shape_cast %13 : vector<1x16x1xf32> to vector<16x1xf32>
    %cst_13 = arith.constant dense<0.000000e+00> : vector<16xf32>
    %15 = vector.multi_reduction <add>, %6, %cst_13 [1] : vector<16x512xf32> to vector<16xf32>
    %16 = vector.shape_cast %15 : vector<16xf32> to vector<16x1xf32>
    %17 = arith.addf %14, %16 : vector<16x1xf32>
    %c0_14 = arith.constant 0 : index
    %c0_15 = arith.constant 0 : index
    %c0_16 = arith.constant 0 : index
    %18 = vector.load %arg6[%c0_14, %c0_15, %c0_16] : memref<1x16x1xf32, #tpu.memory_space<vmem>>, vector<1x16x1xf32>
    %19 = vector.shape_cast %18 : vector<1x16x1xf32> to vector<16x1xf32>
    %20 = vector.shape_cast %17 : vector<16x1xf32> to vector<1x16x1xf32>
    tpu.vector_store %arg6[%c0_14, %c0_15, %c0_16], %20 {strides = array<i32>} : memref<1x16x1xf32, #tpu.memory_space<vmem>>, vector<1x16x1xf32>,
    %c0_17 = arith.constant 0 : index
    %c0_18 = arith.constant 0 : index
    %c0_19 = arith.constant 0 : index
    %21 = vector.load %arg7[%c0_17, %c0_18, %c0_19] : memref<1x16x1xf32, #tpu.memory_space<vmem>>, vector<1x16x1xf32>
    %22 = vector.shape_cast %21 : vector<1x16x1xf32> to vector<16x1xf32>
    %23 = arith.mulf %6, %6 : vector<16x512xf32>
    %cst_20 = arith.constant dense<0.000000e+00> : vector<16xf32>
    %24 = vector.multi_reduction <add>, %23, %cst_20 [1] : vector<16x512xf32> to vector<16xf32>
    %25 = vector.shape_cast %24 : vector<16xf32> to vector<16x1xf32>
    %26 = arith.addf %22, %25 : vector<16x1xf32>
    %c0_21 = arith.constant 0 : index
    %c0_22 = arith.constant 0 : index
    %c0_23 = arith.constant 0 : index
    %27 = vector.load %arg7[%c0_21, %c0_22, %c0_23] : memref<1x16x1xf32, #tpu.memory_space<vmem>>, vector<1x16x1xf32>
    %28 = vector.shape_cast %27 : vector<1x16x1xf32> to vector<16x1xf32>
    %29 = vector.shape_cast %26 : vector<16x1xf32> to vector<1x16x1xf32>
    tpu.vector_store %arg7[%c0_21, %c0_22, %c0_23], %29 {strides = array<i32>} : memref<1x16x1xf32, #tpu.memory_space<vmem>>, vector<1x16x1xf32>,
    return
  }
  func.func @transform_0(%arg0: i32, %arg1: i32) -> (i32, i32, i32) {
    %c0_i32 = arith.constant 0 : i32
    %c0_i32_0 = arith.constant 0 : i32
    return %arg0, %c0_i32, %arg1 : i32, i32, i32
  }
  func.func @transform_1(%arg0: i32, %arg1: i32) -> (i32, i32) {
    %c0_i32 = arith.constant 0 : i32
    %c0_i32_0 = arith.constant 0 : i32
    %c0_i32_1 = arith.constant 0 : i32
    return %c0_i32, %c0_i32_0 : i32, i32
  }
  func.func @transform_2(%arg0: i32, %arg1: i32) -> (i32, i32) {
    %c0_i32 = arith.constant 0 : i32
    %c0_i32_0 = arith.constant 0 : i32
    %c0_i32_1 = arith.constant 0 : i32
    return %c0_i32, %c0_i32_0 : i32, i32
  }
  func.func @transform_3(%arg0: i32, %arg1: i32) -> (i32, i32, i32) {
    %c0_i32 = arith.constant 0 : i32
    %c0_i32_0 = arith.constant 0 : i32
    return %arg0, %c0_i32, %arg1 : i32, i32, i32
  }
  func.func @transform_4(%arg0: i32, %arg1: i32) -> (i32, i32, i32) {
    %c0_i32 = arith.constant 0 : i32
    %c0_i32_0 = arith.constant 0 : i32
    %c0_i32_1 = arith.constant 0 : i32
    return %arg0, %c0_i32, %c0_i32_0 : i32, i32, i32
  }
  func.func @transform_5(%arg0: i32, %arg1: i32) -> (i32, i32, i32) {
    %c0_i32 = arith.constant 0 : i32
    %c0_i32_0 = arith.constant 0 : i32
    %c0_i32_1 = arith.constant 0 : i32
    return %arg0, %c0_i32, %c0_i32_0 : i32, i32, i32
  }
}

module attributes {stable_mosaic.version = 11 : i64} {
  func.func @_norm_act_kernel(%arg0: i32, %arg1: i32, %arg2: memref<1x16x512xf32, #tpu.memory_space<vmem>>, %arg3: memref<1x16x1xf32, #tpu.memory_space<vmem>>, %arg4: memref<1x16x1xf32, #tpu.memory_space<vmem>>, %arg5: memref<1x16x512xf32, #tpu.memory_space<vmem>>) attributes {dimension_semantics = [#tpu.dimension_semantics<parallel>, #tpu.dimension_semantics<parallel>], iteration_bounds = array<i64: 2, 1>, scalar_prefetch = 0 : i64, scratch_operands = 0 : i64, tpu.core_type = #tpu.core_type<tc>, window_params = [{transform_indices = @transform_0, window_bounds = array<i64: 1, 16, 512>}, {transform_indices = @transform_1, window_bounds = array<i64: 1, 16, 1>}, {transform_indices = @transform_2, window_bounds = array<i64: 1, 16, 1>}, {transform_indices = @transform_3, window_bounds = array<i64: 1, 16, 512>}]} {
    %c0 = arith.constant 0 : index
    %c0_0 = arith.constant 0 : index
    %c0_1 = arith.constant 0 : index
    %0 = vector.load %arg2[%c0, %c0_0, %c0_1] : memref<1x16x512xf32, #tpu.memory_space<vmem>>, vector<1x16x512xf32>
    %1 = vector.shape_cast %0 : vector<1x16x512xf32> to vector<16x512xf32>
    %c0_2 = arith.constant 0 : index
    %c0_3 = arith.constant 0 : index
    %c0_4 = arith.constant 0 : index
    %2 = vector.load %arg3[%c0_2, %c0_3, %c0_4] : memref<1x16x1xf32, #tpu.memory_space<vmem>>, vector<1x16x1xf32>
    %3 = vector.shape_cast %2 : vector<1x16x1xf32> to vector<16x1xf32>
    %4 = vector.broadcast %3 : vector<16x1xf32> to vector<16x512xf32>
    %5 = arith.subf %1, %4 : vector<16x512xf32>
    %c0_5 = arith.constant 0 : index
    %c0_6 = arith.constant 0 : index
    %c0_7 = arith.constant 0 : index
    %6 = vector.load %arg4[%c0_5, %c0_6, %c0_7] : memref<1x16x1xf32, #tpu.memory_space<vmem>>, vector<1x16x1xf32>
    %7 = vector.shape_cast %6 : vector<1x16x1xf32> to vector<16x1xf32>
    %8 = vector.broadcast %7 : vector<16x1xf32> to vector<16x512xf32>
    %9 = arith.mulf %5, %8 : vector<16x512xf32>
    %cst = arith.constant 0.000000e+00 : f32
    %10 = vector.broadcast %cst : f32 to vector<16x512xf32>
    %11 = arith.cmpf oge, %9, %10 : vector<16x512xf32>
    %cst_8 = arith.constant 0.00999999977 : f32
    %12 = vector.broadcast %cst_8 : f32 to vector<16x512xf32>
    %13 = arith.mulf %12, %9 : vector<16x512xf32>
    %14 = arith.select %11, %9, %13 : vector<16x512xi1>, vector<16x512xf32>
    %c0_9 = arith.constant 0 : index
    %c0_10 = arith.constant 0 : index
    %c0_11 = arith.constant 0 : index
    %15 = vector.load %arg5[%c0_9, %c0_10, %c0_11] : memref<1x16x512xf32, #tpu.memory_space<vmem>>, vector<1x16x512xf32>
    %16 = vector.shape_cast %15 : vector<1x16x512xf32> to vector<16x512xf32>
    %17 = vector.shape_cast %14 : vector<16x512xf32> to vector<1x16x512xf32>
    tpu.vector_store %arg5[%c0_9, %c0_10, %c0_11], %17 {strides = array<i32>} : memref<1x16x512xf32, #tpu.memory_space<vmem>>, vector<1x16x512xf32>,
    return
  }
  func.func @transform_0(%arg0: i32, %arg1: i32) -> (i32, i32, i32) {
    %c0_i32 = arith.constant 0 : i32
    %c0_i32_0 = arith.constant 0 : i32
    return %arg0, %c0_i32, %arg1 : i32, i32, i32
  }
  func.func @transform_1(%arg0: i32, %arg1: i32) -> (i32, i32, i32) {
    %c0_i32 = arith.constant 0 : i32
    %c0_i32_0 = arith.constant 0 : i32
    %c0_i32_1 = arith.constant 0 : i32
    return %arg0, %c0_i32, %c0_i32_0 : i32, i32, i32
  }
  func.func @transform_2(%arg0: i32, %arg1: i32) -> (i32, i32, i32) {
    %c0_i32 = arith.constant 0 : i32
    %c0_i32_0 = arith.constant 0 : i32
    %c0_i32_1 = arith.constant 0 : i32
    return %arg0, %c0_i32, %c0_i32_0 : i32, i32, i32
  }
  func.func @transform_3(%arg0: i32, %arg1: i32) -> (i32, i32, i32) {
    %c0_i32 = arith.constant 0 : i32
    %c0_i32_0 = arith.constant 0 : i32
    return %arg0, %c0_i32, %arg1 : i32, i32, i32
  }
}

</mosaic_0001>

<llo_original>
// kernel: up_conv_forward.2
$region0: #{up_conv_forward.2}
  #allocation0 [shape = 'u32[]', space=smem, size = 0x4, offset = 0x4, fixed_abs, tag = 'smem constant byte address 0x4 - core index']
  #allocation1 [shape = 'u32[144,128]{1,0:T(1,128)}', space=vmem, size = 0x12000, scoped, tag = 'internal scratch']
  %s0 = inlined_call_operand.vmem [shape: bf16[2,128,512], index: 0, kind: input, shape index: {}]
  %s1 = inlined_call_operand.vmem [shape: bf16[16,128], index: 1, kind: input, shape index: {}]
  %s2 = inlined_call_operand.vmem [shape: f32[16,1], index: 2, kind: input, shape index: {}]
  %s3 = inlined_call_operand.vmem [shape: f32[2,16,512], index: 3, kind: output, shape index: {0}]
  %s4 = inlined_call_operand.vmem [shape: f32[2,16,1], index: 4, kind: output, shape index: {1}]
  %s5 = inlined_call_operand.vmem [shape: f32[2,16,1], index: 5, kind: output, shape index: {2}]
  %6 = xla_tuple %s3, %s4, %s5
  %s7 = sld [smem:[#allocation0]]
  $region65: #{up_conv_forward.2} parent=0
    _
  %s9 = ssub.s32 1, %s7
  %s10 = scalar_select 0, %s9, %s7
  loop: start=0, step=1, limit=4
  $region2: #{up_conv_forward.2} parent=0 // loop_pre_header
    _
  $region3: #{up_conv_forward.2} parent=0 // loop_header
    %s12 = sphi 0, %s16
    %p13 = scmp.ge.s32.totalorder %s12, 4
    %s19 = sphi 0, %s31
    %s20 = sphi 0, %s27
    %s21 = sphi 0, %s19
    %s22 = sphi 0, %s20
    %s23 = sphi 0, %s21
    %s24 = sphi 0, %s22
    %s36 = sphi 0, %s38
    %s39 = sphi 0, %s36
    %s40 = sphi 0, %s39
    %s56 = sphi 0, %s40
    %s60 = sphi 0, %s60
    %s62 = sphi 0, %s60
    %s63 = sphi 0, %s62
    %s77 = sphi 0, %s63
    %s81 = sphi 0, %s81
    %s83 = sphi 0, %s81
    %s84 = sphi 0, %s83
    %s98 = sphi 0, %s84
    %s106 = sphi 0, %s108
    %s109 = sphi 0, %s106
    %s110 = sphi 0, %s109
    %s126 = sphi 0, %s110
    %s132 = sphi 0, %s134
    %s135 = sphi 0, %s132
    %s136 = sphi 0, %s135
    %s152 = sphi 0, %s136
    %s158 = sphi 0, %s160
    %s161 = sphi 0, %s158
    %s162 = sphi 0, %s161
    %s178 = sphi 0, %s162
  $region4: #{up_conv_forward.2} parent=0 // loop_header_branch
    %15 = sbr.rel (%p13) target = $region8
  $region5: #{up_conv_forward.2} parent=0 // loop_body
    %s17 = ssub.s32 %s12, 1
    %s18 = ssub.s32 %s12, 2
    %s25 = sadd.s32 1, %s20
    %p26 = scmp.ge.s32.totalorder %s25, 1
    %s27 = scalar_select %p26, 0, %s25
    %s28 = sadd.s32 1, %s19
    %s29 = scalar_select %p26, %s28, %s19
    %p30 = scmp.ge.s32.totalorder %s29, 2
    %s31 = scalar_select %p30, 0, %s29
    %s32 = ssub.s32 %s19, %s31
    %s33 = ssub.s32 %s20, %s27
    %s34 = sor.u32 %s32, %s33
    %p35 = scmp.eq.s32.totalorder %s34, 0
    %s37 = sadd.s32 %s36, 1
    %s38 = scalar_select %p35, %s36, %s37
    %p41 = pneg %p35
    %p42 = scmp.eq.s32.totalorder %s12, 1
    %p43 = por %p41, %p42
    %p44 = scmp.ne.s32.totalorder %s36, %s39
    %p45 = scmp.eq.s32.totalorder %s12, 0
    %p46 = por %p44, %p45
    %p47 = scmp.ne.s32.totalorder %s36, %s39
    %p48 = scmp.eq.s32.totalorder %s17, 1
    %p49 = por %p47, %p48
    %p50 = scmp.ne.s32.totalorder %s39, %s40
    %p51 = scmp.eq.s32.totalorder %s17, 0
    %p52 = por %p50, %p51
    %p53 = scmp.ne.s32.totalorder %s39, %s40
    %p54 = scmp.eq.s32.totalorder %s18, 1
    %p55 = por %p53, %p54
    %p57 = scmp.ne.s32.totalorder %s40, %s56
    %p58 = scmp.eq.s32.totalorder %s18, 0
    %p59 = por %p57, %p58
    %s61 = sadd.s32 %s60, 1
    %p64 = scmp.eq.s32.totalorder %s12, 1
    %p65 = scmp.ne.s32.totalorder %s60, %s62
    %p66 = scmp.eq.s32.totalorder %s12, 0
    %p67 = por %p65, %p66
    %p68 = scmp.ne.s32.totalorder %s60, %s62
    %p69 = scmp.eq.s32.totalorder %s17, 1
    %p70 = por %p68, %p69
    %p71 = scmp.ne.s32.totalorder %s62, %s63
    %p72 = scmp.eq.s32.totalorder %s17, 0
    %p73 = por %p71, %p72
    %p74 = scmp.ne.s32.totalorder %s62, %s63
    %p75 = scmp.eq.s32.totalorder %s18, 1
    %p76 = por %p74, %p75
    %p78 = scmp.ne.s32.totalorder %s63, %s77
    %p79 = scmp.eq.s32.totalorder %s18, 0
    %p80 = por %p78, %p79
    %s82 = sadd.s32 %s81, 1
    %p85 = scmp.eq.s32.totalorder %s12, 1
    %p86 = scmp.ne.s32.totalorder %s81, %s83
    %p87 = scmp.eq.s32.totalorder %s12, 0
    %p88 = por %p86, %p87
    %p89 = scmp.ne.s32.totalorder %s81, %s83
    %p90 = scmp.eq.s32.totalorder %s17, 1
    %p91 = por %p89, %p90
    %p92 = scmp.ne.s32.totalorder %s83, %s84
    %p93 = scmp.eq.s32.totalorder %s17, 0
    %p94 = por %p92, %p93
    %p95 = scmp.ne.s32.totalorder %s83, %s84
    %p96 = scmp.eq.s32.totalorder %s18, 1
    %p97 = por %p95, %p96
    %p99 = scmp.ne.s32.totalorder %s84, %s98
    %p100 = scmp.eq.s32.totalorder %s18, 0
    %p101 = por %p99, %p100
    %s102 = ssub.s32 %s19, %s31
    %s103 = ssub.s32 %s20, %s27
    %s104 = sor.u32 %s102, %s103
    %p105 = scmp.eq.s32.totalorder %s104, 0
    %s107 = sadd.s32 %s106, 1
    %s108 = scalar_select %p105, %s106, %s107
    %p111 = pneg %p105
    %p112 = scmp.eq.s32.totalorder %s12, 1
    %p113 = por %p111, %p112
    %p114 = scmp.ne.s32.totalorder %s106, %s109
    %p115 = scmp.eq.s32.totalorder %s12, 0
    %p116 = por %p114, %p115
    %p117 = scmp.ne.s32.totalorder %s106, %s109
    %p118 = scmp.eq.s32.totalorder %s17, 1
    %p119 = por %p117, %p118
    %p120 = scmp.ne.s32.totalorder %s109, %s110
    %p121 = scmp.eq.s32.totalorder %s17, 0
    %p122 = por %p120, %p121
    %p123 = scmp.ne.s32.totalorder %s109, %s110
    %p124 = scmp.eq.s32.totalorder %s18, 1
    %p125 = por %p123, %p124
    %p127 = scmp.ne.s32.totalorder %s110, %s126
    %p128 = scmp.eq.s32.totalorder %s18, 0
    %p129 = por %p127, %p128
    %s130 = ssub.s32 %s19, %s31
    %p131 = scmp.eq.s32.totalorder %s130, 0
    %s133 = sadd.s32 %s132, 1
    %s134 = scalar_select %p131, %s132, %s133
    %p137 = pneg %p131
    %p138 = scmp.eq.s32.totalorder %s12, 1
    %p139 = por %p137, %p138
    %p140 = scmp.ne.s32.totalorder %s132, %s135
    %p141 = scmp.eq.s32.totalorder %s12, 0
    %p142 = por %p140, %p141
    %p143 = scmp.ne.s32.totalorder %s132, %s135
    %p144 = scmp.eq.s32.totalorder %s17, 1
    %p145 = por %p143, %p144
    %p146 = scmp.ne.s32.totalorder %s135, %s136
    %p147 = scmp.eq.s32.totalorder %s17, 0
    %p148 = por %p146, %p147
    %p149 = scmp.ne.s32.totalorder %s135, %s136
    %p150 = scmp.eq.s32.totalorder %s18, 1
    %p151 = por %p149, %p150
    %p153 = scmp.ne.s32.totalorder %s136, %s152
    %p154 = scmp.eq.s32.totalorder %s18, 0
    %p155 = por %p153, %p154
    %s156 = ssub.s32 %s19, %s31
    %p157 = scmp.eq.s32.totalorder %s156, 0
    %s159 = sadd.s32 %s158, 1
    %s160 = scalar_select %p157, %s158, %s159
    %p163 = pneg %p157
    %p164 = scmp.eq.s32.totalorder %s12, 1
    %p165 = por %p163, %p164
    %p166 = scmp.ne.s32.totalorder %s158, %s161
    %p167 = scmp.eq.s32.totalorder %s12, 0
    %p168 = por %p166, %p167
    %p169 = scmp.ne.s32.totalorder %s158, %s161
    %p170 = scmp.eq.s32.totalorder %s17, 1
    %p171 = por %p169, %p170
    %p172 = scmp.ne.s32.totalorder %s161, %s162
    %p173 = scmp.eq.s32.totalorder %s17, 0
    %p174 = por %p172, %p173
    %p175 = scmp.ne.s32.totalorder %s161, %s162
    %p176 = scmp.eq.s32.totalorder %s18, 1
    %p177 = por %p175, %p176
    %p179 = scmp.ne.s32.totalorder %s162, %s178
    %p180 = scmp.eq.s32.totalorder %s18, 0
    %p181 = por %p179, %p180
    %p182 = scmp.le.s32.totalorder 1, %s12
    %p183 = scmp.lt.s32.totalorder %s12, 3
    %p184 = pnand %p182, %p183
    %p185 = pneg %p184
    // Predicated region
    $region9: #{up_conv_forward.2} parent=5 // pred_check
      _
    $region10: #{up_conv_forward.2} parent=5 // pred_check_branch
      %187 = sbr.rel (%p184) target = $region12
    $region11: #{up_conv_forward.2} parent=5 // pred_region
      %s188 = ssub.s32 %s12, 1
      // Predicated region
      $region13: #{up_conv_forward.2} parent=11 // pred_check
        %p189 = pneg %p73
      $region14: #{up_conv_forward.2} parent=11 // pred_check_branch
        %191 = sbr.rel (%p189) target = $region16
      $region15: #{up_conv_forward.2} parent=11 // pred_region
        _
      $region16: #{up_conv_forward.2} parent=11 // pred_fallthru
        _
      // Predicated region
      $region17: #{up_conv_forward.2} parent=11 // pred_check
        %p192 = pneg %p94
      $region18: #{up_conv_forward.2} parent=11 // pred_check_branch
        %194 = sbr.rel (%p192) target = $region20
      $region19: #{up_conv_forward.2} parent=11 // pred_region
        _
      $region20: #{up_conv_forward.2} parent=11 // pred_fallthru
        _
    $region12: #{up_conv_forward.2} parent=5 // pred_fallthru
      _
    %p195 = scmp.lt.s32.totalorder %s12, 2
    // Predicated region
    $region21: #{up_conv_forward.2} parent=5 // pred_check
      %p196 = pneg %p195
    $region22: #{up_conv_forward.2} parent=5 // pred_check_branch
      %198 = sbr.rel (%p196) target = $region24
    $region23: #{up_conv_forward.2} parent=5 // pred_region
      // Predicated region
      $region25: #{up_conv_forward.2} parent=23 // pred_check
        %p199 = pneg %p46
      $region26: #{up_conv_forward.2} parent=23 // pred_check_branch
        %201 = sbr.rel (%p199) target = $region28
      $region27: #{up_conv_forward.2} parent=23 // pred_region
        %s202 = smul.u32 4, %s20
        %p203 = scmp.lt.s32.totalorder %s19, 1
        %s204 = scalar_select %p203, %s19, 1
        %p205 = scmp.lt.s32.totalorder %s202, 3
        %s206 = scalar_select %p205, %s202, 3
        %s207 = smul.addr %s204, 64
        %s208 = sadd.s32 %s206, %s207
        %s209 = smul.addr %s208, 4
        %s210 = scalar_lea.vmem %s0, %s209
        %s211 = smul.u32 4, %s20
      $region28: #{up_conv_forward.2} parent=23 // pred_fallthru
        _
    $region24: #{up_conv_forward.2} parent=5 // pred_fallthru
      _
    %p212 = scmp.le.s32.totalorder 1, %s12
    %p213 = scmp.lt.s32.totalorder %s12, 3
    %p214 = pnand %p212, %p213
    %p215 = pneg %p214
    // Predicated region
    $region29: #{up_conv_forward.2} parent=5 // pred_check
      _
    $region30: #{up_conv_forward.2} parent=5 // pred_check_branch
      %217 = sbr.rel (%p214) target = $region32
    $region31: #{up_conv_forward.2} parent=5 // pred_region
      %s218 = ssub.s32 %s12, 1
      %s219 = smul.u32 4, %s22
      %p220 = scmp.lt.s32.totalorder %s21, 1
      %s221 = scalar_select %p220, %s21, 1
      %p222 = scmp.lt.s32.totalorder %s219, 3
      %s223 = scalar_select %p222, %s219, 3
      %s224 = smul.addr %s221, 64
      %s225 = sadd.s32 %s223, %s224
      %s226 = smul.addr %s225, 4
      %s227 = scalar_lea.vmem %s0, %s226
      %p228 = pneg %p52
      %p229 = pneg %p49
      %p230 = pneg %p73
      %p231 = pneg %p70
      %p232 = pneg %p94
      %p233 = pneg %p91
      %p234 = pneg %p122
      %p235 = pneg %p119
      %s236 = smul.u32 4, %s22
      %p237 = scmp.lt.s32.totalorder %s21, 1
      %s238 = scalar_select %p237, %s21, 1
      %p239 = scmp.lt.s32.totalorder %s236, 3
      %s240 = scalar_select %p239, %s236, 3
      %s241 = smul.addr %s238, 8
      %s242 = sadd.s32 %s240, %s241
      %s243 = smul.addr %s242, 8
      %s244 = scalar_lea.vmem %s3, %s243
      %p245 = pneg %p148
      %p246 = pneg %p145
      %p247 = scmp.lt.s32.totalorder %s21, 1
      %s248 = scalar_select %p247, %s21, 1
      %s249 = smul.addr %s248, 2
      %s250 = smul.addr %s249, 8
      %s251 = scalar_lea.vmem %s4, %s250
      %p252 = pneg %p174
      %p253 = pneg %p171
      %p254 = scmp.lt.s32.totalorder %s21, 1
      %s255 = scalar_select %p254, %s21, 1
      %s256 = smul.addr %s255, 2
      %s257 = smul.addr %s256, 8
      %s258 = scalar_lea.vmem %s5, %s257
      %s259 = smul.u32 4, %s22
      %p260 = scmp.lt.s32.totalorder %s21, 1
      %s261 = scalar_select %p260, %s21, 1
      %p262 = scmp.lt.s32.totalorder %s259, 3
      %s263 = scalar_select %p262, %s259, 3
      %s264 = smul.addr %s261, 64
      %s265 = sadd.s32 %s263, %s264
      %s266 = smul.addr %s265, 4
      %s267 = scalar_lea.vmem %s0, %s266
      %s268 = smul.u32 4, %s22
      %s269 = smul.u32 4, %s22
      %p270 = scmp.lt.s32.totalorder %s21, 1
      %s271 = scalar_select %p270, %s21, 1
      %p272 = scmp.lt.s32.totalorder %s269, 3
      %s273 = scalar_select %p272, %s269, 3
      %s274 = smul.addr %s271, 8
      %s275 = sadd.s32 %s273, %s274
      %s276 = smul.addr %s275, 8
      %s277 = scalar_lea.vmem %s3, %s276
      %s278 = smul.u32 4, %s22
      %p279 = scmp.lt.s32.totalorder %s21, 1
      %s280 = scalar_select %p279, %s21, 1
      %s281 = smul.addr %s280, 2
      %s282 = smul.addr %s281, 8
      %s283 = scalar_lea.vmem %s4, %s282
      %p284 = scmp.lt.s32.totalorder %s21, 1
      %s285 = scalar_select %p284, %s21, 1
      %s286 = smul.addr %s285, 2
      %s287 = smul.addr %s286, 8
      %s288 = scalar_lea.vmem %s5, %s287
      %p290 = scmp.eq.s32.totalorder %s22, 0
      // Predicated region
      $region33: #{up_conv_forward.2} parent=31 // pred_check
        %p291 = pneg %p290
      $region34: #{up_conv_forward.2} parent=31 // pred_check_branch
        %293 = sbr.rel (%p291) target = $region36
      $region35: #{up_conv_forward.2} parent=31 // pred_region
        %vm294 = vcmask 7168
        %295 = vst.msk [vmem:[%s283] sm:$0xff] %vm294, 0.0
        %296 = vst.msk [vmem:[%s283 + $0x8] sm:$0xff] %vm294, 0.0
        %297 = vst.msk [vmem:[%s288] sm:$0xff] %vm294, 0.0
        %298 = vst.msk [vmem:[%s288 + $0x8] sm:$0xff] %vm294, 0.0
      $region36: #{up_conv_forward.2} parent=31 // pred_fallthru
        _
      %v299 = vld [vmem:[%s1] sm:$0xf]
      %v300 = vld [vmem:[%s1 + $0x4] sm:$0xf]
      %v301 = vld [vmem:[%s267] sm:$0xff]
      %v302 = vld [vmem:[%s267 + $0x8] sm:$0xff]
      %v303 = vld [vmem:[%s267 + $0x10] sm:$0xff]
      %v304 = vld [vmem:[%s267 + $0x18] sm:$0xff]
      %v305 = vld [vmem:[%s267 + $0x20] sm:$0xff]
      %v306 = vld [vmem:[%s267 + $0x28] sm:$0xff]
      %v307 = vld [vmem:[%s267 + $0x30] sm:$0xff]
      %v308 = vld [vmem:[%s267 + $0x38] sm:$0xff]
      %v309 = vld [vmem:[%s267 + $0x40] sm:$0xff]
      %v310 = vld [vmem:[%s267 + $0x48] sm:$0xff]
      %v311 = vld [vmem:[%s267 + $0x50] sm:$0xff]
      %v312 = vld [vmem:[%s267 + $0x58] sm:$0xff]
      %v313 = vld [vmem:[%s267 + $0x60] sm:$0xff]
      %v314 = vld [vmem:[%s267 + $0x68] sm:$0xff]
      %v315 = vld [vmem:[%s267 + $0x70] sm:$0xff]
      %v316 = vld [vmem:[%s267 + $0x78] sm:$0xff]
      %v317 = vld [vmem:[%s267 + $0x80] sm:$0xff]
      %v318 = vld [vmem:[%s267 + $0x88] sm:$0xff]
      %v319 = vld [vmem:[%s267 + $0x90] sm:$0xff]
      %v320 = vld [vmem:[%s267 + $0x98] sm:$0xff]
      %v321 = vld [vmem:[%s267 + $0xa0] sm:$0xff]
      %v322 = vld [vmem:[%s267 + $0xa8] sm:$0xff]
      %v323 = vld [vmem:[%s267 + $0xb0] sm:$0xff]
      %v324 = vld [vmem:[%s267 + $0xb8] sm:$0xff]
      %v325 = vld [vmem:[%s267 + $0xc0] sm:$0xff]
      %v326 = vld [vmem:[%s267 + $0xc8] sm:$0xff]
      %v327 = vld [vmem:[%s267 + $0xd0] sm:$0xff]
      %v328 = vld [vmem:[%s267 + $0xd8] sm:$0xff]
      %v329 = vld [vmem:[%s267 + $0xe0] sm:$0xff]
      %v330 = vld [vmem:[%s267 + $0xe8] sm:$0xff]
      %v331 = vld [vmem:[%s267 + $0xf0] sm:$0xff]
      %v332 = vld [vmem:[%s267 + $0xf8] sm:$0xff]
      %v335 = vunpack.c.l.b16 %v299
      %v336 = vunpack.c.l.b16 %v300
      %v337 = vpack.c.b16 %v336, %v335
      %v371 = vunpack.c.l.b16 %v301
      %v372 = vunpack.c.h.b16 %v301
      %v373 = vunpack.c.l.b16 %v302
      %v374 = vunpack.c.h.b16 %v302
      %v375 = vunpack.c.l.b16 %v303
      %v376 = vunpack.c.h.b16 %v303
      %v377 = vunpack.c.l.b16 %v304
      %v378 = vunpack.c.h.b16 %v304
      %v379 = vunpack.c.l.b16 %v305
      %v380 = vunpack.c.h.b16 %v305
      %v381 = vunpack.c.l.b16 %v306
      %v382 = vunpack.c.h.b16 %v306
      %v383 = vunpack.c.l.b16 %v307
      %v384 = vunpack.c.h.b16 %v307
      %v385 = vunpack.c.l.b16 %v308
      %v386 = vunpack.c.h.b16 %v308
      %v387 = vunpack.c.l.b16 %v309
      %v388 = vunpack.c.h.b16 %v309
      %v389 = vunpack.c.l.b16 %v310
      %v390 = vunpack.c.h.b16 %v310
      %v391 = vunpack.c.l.b16 %v311
      %v392 = vunpack.c.h.b16 %v311
      %v393 = vunpack.c.l.b16 %v312
      %v394 = vunpack.c.h.b16 %v312
      %v395 = vunpack.c.l.b16 %v313
      %v396 = vunpack.c.h.b16 %v313
      %v397 = vunpack.c.l.b16 %v314
      %v398 = vunpack.c.h.b16 %v314
      %v399 = vunpack.c.l.b16 %v315
      %v400 = vunpack.c.h.b16 %v315
      %v401 = vunpack.c.l.b16 %v316
      %v402 = vunpack.c.h.b16 %v316
      %v403 = vunpack.c.l.b16 %v317
      %v404 = vunpack.c.h.b16 %v317
      %v405 = vunpack.c.l.b16 %v318
      %v406 = vunpack.c.h.b16 %v318
      %v407 = vunpack.c.l.b16 %v319
      %v408 = vunpack.c.h.b16 %v319
      %v409 = vunpack.c.l.b16 %v320
      %v410 = vunpack.c.h.b16 %v320
      %v411 = vunpack.c.l.b16 %v321
      %v412 = vunpack.c.h.b16 %v321
      %v413 = vunpack.c.l.b16 %v322
      %v414 = vunpack.c.h.b16 %v322
      %v415 = vunpack.c.l.b16 %v323
      %v416 = vunpack.c.h.b16 %v323
      %v417 = vunpack.c.l.b16 %v324
      %v418 = vunpack.c.h.b16 %v324
      %v419 = vunpack.c.l.b16 %v325
      %v420 = vunpack.c.h.b16 %v325
      %v421 = vunpack.c.l.b16 %v326
      %v422 = vunpack.c.h.b16 %v326
      %v423 = vunpack.c.l.b16 %v327
      %v424 = vunpack.c.h.b16 %v327
      %v425 = vunpack.c.l.b16 %v328
      %v426 = vunpack.c.h.b16 %v328
      %v427 = vunpack.c.l.b16 %v329
      %v428 = vunpack.c.h.b16 %v329
      %v429 = vunpack.c.l.b16 %v330
      %v430 = vunpack.c.h.b16 %v330
      %v431 = vunpack.c.l.b16 %v331
      %v432 = vunpack.c.h.b16 %v331
      %v433 = vunpack.c.l.b16 %v332
      %v434 = vunpack.c.h.b16 %v332
      %v435 = vpack.c.b16 %v375, %v371
      %v436 = vpack.c.b16 %v376, %v372
      %v437 = vpack.c.b16 %v377, %v373
      %v438 = vpack.c.b16 %v378, %v374
      %v439 = vpack.c.b16 %v383, %v379
      %v440 = vpack.c.b16 %v384, %v380
      %v441 = vpack.c.b16 %v385, %v381
      %v442 = vpack.c.b16 %v386, %v382
      %v443 = vpack.c.b16 %v391, %v387
      %v444 = vpack.c.b16 %v392, %v388
      %v445 = vpack.c.b16 %v393, %v389
      %v446 = vpack.c.b16 %v394, %v390
      %v447 = vpack.c.b16 %v399, %v395
      %v448 = vpack.c.b16 %v400, %v396
      %v449 = vpack.c.b16 %v401, %v397
      %v450 = vpack.c.b16 %v402, %v398
      %v451 = vpack.c.b16 %v407, %v403
      %v452 = vpack.c.b16 %v408, %v404
      %v453 = vpack.c.b16 %v409, %v405
      %v454 = vpack.c.b16 %v410, %v406
      %v455 = vpack.c.b16 %v415, %v411
      %v456 = vpack.c.b16 %v416, %v412
      %v457 = vpack.c.b16 %v417, %v413
      %v458 = vpack.c.b16 %v418, %v414
      %v459 = vpack.c.b16 %v423, %v419
      %v460 = vpack.c.b16 %v424, %v420
      %v461 = vpack.c.b16 %v425, %v421
      %v462 = vpack.c.b16 %v426, %v422
      %v463 = vpack.c.b16 %v431, %v427
      %v464 = vpack.c.b16 %v432, %v428
      %v465 = vpack.c.b16 %v433, %v429
      %v466 = vpack.c.b16 %v434, %v430
      %499 = vmatprep.subr.bf16.mxu0 %v436
      %500 = vmatpush1.bf16.msra.mxu0 %v435
      %501 = vmatprep.subr.bf16.mxu0 %v440
      %502 = vmatpush1.bf16.msra.mxu0 %v439
      %503 = vmatprep.subr.bf16.mxu0 %v444
      %504 = vmatpush1.bf16.msra.mxu0 %v443
      %505 = vmatprep.subr.bf16.mxu0 %v448
      %506 = vmatpush1.bf16.msra.mxu0 %v447
      %507 = vmatprep.subr.bf16.mxu0 %v452
      %508 = vmatpush1.bf16.msra.mxu0 %v451
      %509 = vmatprep.subr.bf16.mxu0 %v456
      %510 = vmatpush1.bf16.msra.mxu0 %v455
      %511 = vmatprep.subr.bf16.mxu0 %v460
      %512 = vmatpush1.bf16.msra.mxu0 %v459
      %513 = vmatprep.subr.bf16.mxu0 %v464
      %514 = vmatpush1.bf16.msra.mxu0 %v463
      %515 = vmatprep.subr.bf16.mxu0 0
      %516 = vmatpush1.bf16.msra.mxu0 0
      %517 = vmatprep.subr.bf16.mxu0 0
      %518 = vmatpush1.bf16.msra.mxu0 0
      %519 = vmatprep.subr.bf16.mxu0 0
      %520 = vmatpush1.bf16.msra.mxu0 0
      %521 = vmatprep.subr.bf16.mxu0 0
      %522 = vmatpush1.bf16.msra.mxu0 0
      %523 = vmatprep.subr.bf16.mxu0 0
      %524 = vmatpush1.bf16.msra.mxu0 0
      %525 = vmatprep.subr.bf16.mxu0 0
      %526 = vmatpush1.bf16.msra.mxu0 0
      %527 = vmatprep.subr.bf16.mxu0 0
      %528 = vmatpush1.bf16.msra.mxu0 0
      %529 = vmatprep.subr.bf16.mxu0 0
      %530 = vmatpush1.bf16.msra.mxu0 0
      %531 = vmatprep.mubr.bf16.mxu0 0
      %532 = vmatmul.mubr.bf16.gmra.mrb[0].mxu0 %v337
      %v533 = vpop.f32.mrb[0].mxu0
      %v534 = vadd.f32 0.0, %v533
      %v535 = vpop.f32.mrb[0].mxu0
      %v536 = vadd.f32 0.0, %v535
      %v537 = vpop.f32.mrb[0].mxu0
      %v538 = vadd.f32 0.0, %v537
      %v539 = vpop.f32.mrb[0].mxu0
      %v540 = vadd.f32 0.0, %v539
      %541 = vdwg.mxu0
      %542 = vmatprep.subr.bf16.mxu0 %v438
      %543 = vmatpush1.bf16.msra.mxu0 %v437
      %544 = vmatprep.subr.bf16.mxu0 %v442
      %545 = vmatpush1.bf16.msra.mxu0 %v441
      %546 = vmatprep.subr.bf16.mxu0 %v446
      %547 = vmatpush1.bf16.msra.mxu0 %v445
      %548 = vmatprep.subr.bf16.mxu0 %v450
      %549 = vmatpush1.bf16.msra.mxu0 %v449
      %550 = vmatprep.subr.bf16.mxu0 %v454
      %551 = vmatpush1.bf16.msra.mxu0 %v453
      %552 = vmatprep.subr.bf16.mxu0 %v458
      %553 = vmatpush1.bf16.msra.mxu0 %v457
      %554 = vmatprep.subr.bf16.mxu0 %v462
      %555 = vmatpush1.bf16.msra.mxu0 %v461
      %556 = vmatprep.subr.bf16.mxu0 %v466
      %557 = vmatpush1.bf16.msra.mxu0 %v465
      %558 = vmatprep.subr.bf16.mxu0 0
      %559 = vmatpush1.bf16.msra.mxu0 0
      %560 = vmatprep.subr.bf16.mxu0 0
      %561 = vmatpush1.bf16.msra.mxu0 0
      %562 = vmatprep.subr.bf16.mxu0 0
      %563 = vmatpush1.bf16.msra.mxu0 0
      %564 = vmatprep.subr.bf16.mxu0 0
      %565 = vmatpush1.bf16.msra.mxu0 0
      %566 = vmatprep.subr.bf16.mxu0 0
      %567 = vmatpush1.bf16.msra.mxu0 0
      %568 = vmatprep.subr.bf16.mxu0 0
      %569 = vmatpush1.bf16.msra.mxu0 0
      %570 = vmatprep.subr.bf16.mxu0 0
      %571 = vmatpush1.bf16.msra.mxu0 0
      %572 = vmatprep.subr.bf16.mxu0 0
      %573 = vmatpush1.bf16.msra.mxu0 0
      %574 = vmatprep.mubr.bf16.mxu0 0
      %575 = vmatmul.mubr.bf16.gmra.mrb[0].mxu0 %v337
      %v576 = vpop.f32.mrb[0].mxu0
      %v577 = vadd.f32 0.0, %v576
      %v578 = vpop.f32.mrb[0].mxu0
      %v579 = vadd.f32 0.0, %v578
      %v580 = vpop.f32.mrb[0].mxu0
      %v581 = vadd.f32 0.0, %v580
      %v582 = vpop.f32.mrb[0].mxu0
      %v583 = vadd.f32 0.0, %v582
      %584 = vdwg.mxu0
      %v585 = vld [vmem:[%s2] sm:$0xff]
      %v586 = vld [vmem:[%s2 + $0x8] sm:$0xff]
      %588 = vset.pattern.permute.xlu0 0
      %589 = vperm.xlu0 %588, %v585
      %v590 = vpop.permute.xlu0 %589
      %593 = vset.pattern.permute.xlu0 0
      %594 = vperm.xlu0 %593, %v586
      %v595 = vpop.permute.xlu0 %594
      %v597 = vadd.f32 %v534, %v590
      %v598 = vadd.f32 %v536, %v590
      %v599 = vadd.f32 %v577, %v590
      %v600 = vadd.f32 %v579, %v590
      %v601 = vadd.f32 %v538, %v595
      %v602 = vadd.f32 %v540, %v595
      %v603 = vadd.f32 %v581, %v595
      %v604 = vadd.f32 %v583, %v595
      %605 = vst [vmem:[%s277] sm:$0xff] %v597
      %606 = vst [vmem:[%s277 + $0x8] sm:$0xff] %v598
      %607 = vst [vmem:[%s277 + $0x10] sm:$0xff] %v599
      %608 = vst [vmem:[%s277 + $0x18] sm:$0xff] %v600
      %609 = vst [vmem:[%s277 + $0x20] sm:$0xff] %v601
      %610 = vst [vmem:[%s277 + $0x28] sm:$0xff] %v602
      %611 = vst [vmem:[%s277 + $0x30] sm:$0xff] %v603
      %612 = vst [vmem:[%s277 + $0x38] sm:$0xff] %v604
      %v613 = vld [vmem:[%s283] sm:$0xff]
      %v614 = vld [vmem:[%s283 + $0x8] sm:$0xff]
      %v615 = vadd.f32 %v534, %v536
      %v616 = vadd.f32 %v615, %v577
      %v617 = vadd.f32 %v616, %v579
      %618 = vadd.xlane.f32.xlu0 %v617
      %v619 = vpop.xlane.xlu0 %618
      %v620 = vadd.f32 %v538, %v540
      %v621 = vadd.f32 %v620, %v581
      %v622 = vadd.f32 %v621, %v583
      %623 = vadd.xlane.f32.xlu0 %v622
      %v624 = vpop.xlane.xlu0 %623
      %v625 = vadd.f32 %v613, %v619
      %v626 = vadd.f32 %v614, %v624
      %vm627 = vcmask 7168
      %628 = vst.msk [vmem:[%s283] sm:$0xff] %vm627, %v625
      %629 = vst.msk [vmem:[%s283 + $0x8] sm:$0xff] %vm627, %v626
      %v630 = vld [vmem:[%s288] sm:$0xff]
      %v631 = vld [vmem:[%s288 + $0x8] sm:$0xff]
      %v632 = vmul.f32 %v534, %v534
      %v633 = vmul.f32 %v536, %v536
      %v634 = vmul.f32 %v577, %v577
      %v635 = vmul.f32 %v579, %v579
      %v636 = vmul.f32 %v538, %v538
      %v637 = vmul.f32 %v540, %v540
      %v638 = vmul.f32 %v581, %v581
      %v639 = vmul.f32 %v583, %v583
      %v640 = vadd.f32 %v632, %v633
      %v641 = vadd.f32 %v640, %v634
      %v642 = vadd.f32 %v641, %v635
      %643 = vadd.xlane.f32.xlu0 %v642
      %v644 = vpop.xlane.xlu0 %643
      %v645 = vadd.f32 %v636, %v637
      %v646 = vadd.f32 %v645, %v638
      %v647 = vadd.f32 %v646, %v639
      %648 = vadd.xlane.f32.xlu0 %v647
      %v649 = vpop.xlane.xlu0 %648
      %v650 = vadd.f32 %v630, %v644
      %v651 = vadd.f32 %v631, %v649
      %652 = vst.msk [vmem:[%s288] sm:$0xff] %vm627, %v650
      %653 = vst.msk [vmem:[%s288 + $0x8] sm:$0xff] %vm627, %v651
      %s654 = smul.u32 4, %s22
      %p655 = scmp.lt.s32.totalorder %s21, 1
      %s656 = scalar_select %p655, %s21, 1
      %p657 = scmp.lt.s32.totalorder %s654, 3
      %s658 = scalar_select %p657, %s654, 3
      %s659 = smul.addr %s656, 8
      %s660 = sadd.s32 %s658, %s659
      %s661 = smul.addr %s660, 8
      %s662 = scalar_lea.vmem %s3, %s661
      %p663 = scmp.lt.s32.totalorder %s21, 1
      %s664 = scalar_select %p663, %s21, 1
      %s665 = smul.addr %s664, 2
      %s666 = smul.addr %s665, 8
      %s667 = scalar_lea.vmem %s4, %s666
      %p668 = scmp.lt.s32.totalorder %s21, 1
      %s669 = scalar_select %p668, %s21, 1
      %s670 = smul.addr %s669, 2
      %s671 = smul.addr %s670, 8
      %s672 = scalar_lea.vmem %s5, %s671
      // Predicated region
      $region37: #{up_conv_forward.2} parent=31 // pred_check
        %p673 = pneg %p119
      $region38: #{up_conv_forward.2} parent=31 // pred_check_branch
        %675 = sbr.rel (%p673) target = $region40
      $region39: #{up_conv_forward.2} parent=31 // pred_region
        %s676 = smul.u32 4, %s22
      $region40: #{up_conv_forward.2} parent=31 // pred_fallthru
        _
      // Predicated region
      $region41: #{up_conv_forward.2} parent=31 // pred_check
        %p677 = pneg %p145
      $region42: #{up_conv_forward.2} parent=31 // pred_check_branch
        %679 = sbr.rel (%p677) target = $region44
      $region43: #{up_conv_forward.2} parent=31 // pred_region
        _
      $region44: #{up_conv_forward.2} parent=31 // pred_fallthru
        _
      // Predicated region
      $region45: #{up_conv_forward.2} parent=31 // pred_check
        %p680 = pneg %p171
      $region46: #{up_conv_forward.2} parent=31 // pred_check_branch
        %682 = sbr.rel (%p680) target = $region48
      $region47: #{up_conv_forward.2} parent=31 // pred_region
        _
      $region48: #{up_conv_forward.2} parent=31 // pred_fallthru
        _
    $region32: #{up_conv_forward.2} parent=5 // pred_fallthru
      _
    %p683 = scmp.le.s32.totalorder 2, %s12
    // Predicated region
    $region49: #{up_conv_forward.2} parent=5 // pred_check
      %p684 = pneg %p683
    $region50: #{up_conv_forward.2} parent=5 // pred_check_branch
      %686 = sbr.rel (%p684) target = $region52
    $region51: #{up_conv_forward.2} parent=5 // pred_region
      %s687 = ssub.s32 %s12, 2
      // Predicated region
      $region53: #{up_conv_forward.2} parent=51 // pred_check
        %p688 = pneg %p125
      $region54: #{up_conv_forward.2} parent=51 // pred_check_branch
        %690 = sbr.rel (%p688) target = $region56
      $region55: #{up_conv_forward.2} parent=51 // pred_region
        %s691 = smul.u32 4, %s24
        %p692 = scmp.lt.s32.totalorder %s23, 1
        %s693 = scalar_select %p692, %s23, 1
        %p694 = scmp.lt.s32.totalorder %s691, 3
        %s695 = scalar_select %p694, %s691, 3
        %s696 = smul.addr %s693, 8
        %s697 = sadd.s32 %s695, %s696
        %s698 = smul.addr %s697, 8
        %s699 = scalar_lea.vmem %s3, %s698
      $region56: #{up_conv_forward.2} parent=51 // pred_fallthru
        _
      // Predicated region
      $region57: #{up_conv_forward.2} parent=51 // pred_check
        %p700 = pneg %p151
      $region58: #{up_conv_forward.2} parent=51 // pred_check_branch
        %702 = sbr.rel (%p700) target = $region60
      $region59: #{up_conv_forward.2} parent=51 // pred_region
        %p703 = scmp.lt.s32.totalorder %s23, 1
        %s704 = scalar_select %p703, %s23, 1
        %s705 = smul.addr %s704, 2
        %s706 = smul.addr %s705, 8
        %s707 = scalar_lea.vmem %s4, %s706
      $region60: #{up_conv_forward.2} parent=51 // pred_fallthru
        _
      // Predicated region
      $region61: #{up_conv_forward.2} parent=51 // pred_check
        %p708 = pneg %p177
      $region62: #{up_conv_forward.2} parent=51 // pred_check_branch
        %710 = sbr.rel (%p708) target = $region64
      $region63: #{up_conv_forward.2} parent=51 // pred_region
        %p711 = scmp.lt.s32.totalorder %s23, 1
        %s712 = scalar_select %p711, %s23, 1
        %s713 = smul.addr %s712, 2
        %s714 = smul.addr %s713, 8
        %s715 = scalar_lea.vmem %s5, %s714
      $region64: #{up_conv_forward.2} parent=51 // pred_fallthru
        _
    $region52: #{up_conv_forward.2} parent=5 // pred_fallthru
      _
  $region6: #{up_conv_forward.2} parent=0 // loop_footer
    %s16 = sadd.s32 1, %s12
  $region7: #{up_conv_forward.2} parent=0 // loop_footer_branch
    %11 = sbr.rel target = $region3
  $region8: #{up_conv_forward.2} parent=0 // loop_exit
    _

// kernel: up_conv_forward.3
$region0: #{up_conv_forward.3}
  #allocation0 [shape = 'u32[]', space=smem, size = 0x4, offset = 0x4, fixed_abs, tag = 'smem constant byte address 0x4 - core index']
  #allocation1 [shape = 'u32[144,128]{1,0:T(1,128)}', space=vmem, size = 0x12000, scoped, tag = 'internal scratch']
  %s0 = inlined_call_operand.vmem [shape: f32[2,16,512], index: 0, kind: input, shape index: {}]
  %s1 = inlined_call_operand.vmem [shape: f32[2,16,1], index: 1, kind: input, shape index: {}]
  %s2 = inlined_call_operand.vmem [shape: f32[2,16,1], index: 2, kind: input, shape index: {}]
  %s3 = inlined_call_operand.vmem [shape: f32[2,16,512], index: 3, kind: output, shape index: {}]
  %s4 = sld [smem:[#allocation0]]
  $region45: #{up_conv_forward.3} parent=0
    _
  %s6 = ssub.s32 1, %s4
  %s7 = scalar_select 0, %s6, %s4
  loop: start=0, step=1, limit=4
  $region2: #{up_conv_forward.3} parent=0 // loop_pre_header
    _
  $region3: #{up_conv_forward.3} parent=0 // loop_header
    %s9 = sphi 0, %s13
    %p10 = scmp.ge.s32.totalorder %s9, 4
    %s16 = sphi 0, %s28
    %s17 = sphi 0, %s24
    %s18 = sphi 0, %s16
    %s19 = sphi 0, %s17
    %s20 = sphi 0, %s18
    %s21 = sphi 0, %s19
    %s33 = sphi 0, %s35
    %s36 = sphi 0, %s33
    %s37 = sphi 0, %s36
    %s53 = sphi 0, %s37
    %s59 = sphi 0, %s61
    %s62 = sphi 0, %s59
    %s63 = sphi 0, %s62
    %s79 = sphi 0, %s63
    %s85 = sphi 0, %s87
    %s88 = sphi 0, %s85
    %s89 = sphi 0, %s88
    %s105 = sphi 0, %s89
    %s113 = sphi 0, %s115
    %s116 = sphi 0, %s113
    %s117 = sphi 0, %s116
    %s133 = sphi 0, %s117
  $region4: #{up_conv_forward.3} parent=0 // loop_header_branch
    %12 = sbr.rel (%p10) target = $region8
  $region5: #{up_conv_forward.3} parent=0 // loop_body
    %s14 = ssub.s32 %s9, 1
    %s15 = ssub.s32 %s9, 2
    %s22 = sadd.s32 1, %s17
    %p23 = scmp.ge.s32.totalorder %s22, 1
    %s24 = scalar_select %p23, 0, %s22
    %s25 = sadd.s32 1, %s16
    %s26 = scalar_select %p23, %s25, %s16
    %p27 = scmp.ge.s32.totalorder %s26, 2
    %s28 = scalar_select %p27, 0, %s26
    %s29 = ssub.s32 %s16, %s28
    %s30 = ssub.s32 %s17, %s24
    %s31 = sor.u32 %s29, %s30
    %p32 = scmp.eq.s32.totalorder %s31, 0
    %s34 = sadd.s32 %s33, 1
    %s35 = scalar_select %p32, %s33, %s34
    %p38 = pneg %p32
    %p39 = scmp.eq.s32.totalorder %s9, 1
    %p40 = por %p38, %p39
    %p41 = scmp.ne.s32.totalorder %s33, %s36
    %p42 = scmp.eq.s32.totalorder %s9, 0
    %p43 = por %p41, %p42
    %p44 = scmp.ne.s32.totalorder %s33, %s36
    %p45 = scmp.eq.s32.totalorder %s14, 1
    %p46 = por %p44, %p45
    %p47 = scmp.ne.s32.totalorder %s36, %s37
    %p48 = scmp.eq.s32.totalorder %s14, 0
    %p49 = por %p47, %p48
    %p50 = scmp.ne.s32.totalorder %s36, %s37
    %p51 = scmp.eq.s32.totalorder %s15, 1
    %p52 = por %p50, %p51
    %p54 = scmp.ne.s32.totalorder %s37, %s53
    %p55 = scmp.eq.s32.totalorder %s15, 0
    %p56 = por %p54, %p55
    %s57 = ssub.s32 %s16, %s28
    %p58 = scmp.eq.s32.totalorder %s57, 0
    %s60 = sadd.s32 %s59, 1
    %s61 = scalar_select %p58, %s59, %s60
    %p64 = pneg %p58
    %p65 = scmp.eq.s32.totalorder %s9, 1
    %p66 = por %p64, %p65
    %p67 = scmp.ne.s32.totalorder %s59, %s62
    %p68 = scmp.eq.s32.totalorder %s9, 0
    %p69 = por %p67, %p68
    %p70 = scmp.ne.s32.totalorder %s59, %s62
    %p71 = scmp.eq.s32.totalorder %s14, 1
    %p72 = por %p70, %p71
    %p73 = scmp.ne.s32.totalorder %s62, %s63
    %p74 = scmp.eq.s32.totalorder %s14, 0
    %p75 = por %p73, %p74
    %p76 = scmp.ne.s32.totalorder %s62, %s63
    %p77 = scmp.eq.s32.totalorder %s15, 1
    %p78 = por %p76, %p77
    %p80 = scmp.ne.s32.totalorder %s63, %s79
    %p81 = scmp.eq.s32.totalorder %s15, 0
    %p82 = por %p80, %p81
    %s83 = ssub.s32 %s16, %s28
    %p84 = scmp.eq.s32.totalorder %s83, 0
    %s86 = sadd.s32 %s85, 1
    %s87 = scalar_select %p84, %s85, %s86
    %p90 = pneg %p84
    %p91 = scmp.eq.s32.totalorder %s9, 1
    %p92 = por %p90, %p91
    %p93 = scmp.ne.s32.totalorder %s85, %s88
    %p94 = scmp.eq.s32.totalorder %s9, 0
    %p95 = por %p93, %p94
    %p96 = scmp.ne.s32.totalorder %s85, %s88
    %p97 = scmp.eq.s32.totalorder %s14, 1
    %p98 = por %p96, %p97
    %p99 = scmp.ne.s32.totalorder %s88, %s89
    %p100 = scmp.eq.s32.totalorder %s14, 0
    %p101 = por %p99, %p100
    %p102 = scmp.ne.s32.totalorder %s88, %s89
    %p103 = scmp.eq.s32.totalorder %s15, 1
    %p104 = por %p102, %p103
    %p106 = scmp.ne.s32.totalorder %s89, %s105
    %p107 = scmp.eq.s32.totalorder %s15, 0
    %p108 = por %p106, %p107
    %s109 = ssub.s32 %s16, %s28
    %s110 = ssub.s32 %s17, %s24
    %s111 = sor.u32 %s109, %s110
    %p112 = scmp.eq.s32.totalorder %s111, 0
    %s114 = sadd.s32 %s113, 1
    %s115 = scalar_select %p112, %s113, %s114
    %p118 = pneg %p112
    %p119 = scmp.eq.s32.totalorder %s9, 1
    %p120 = por %p118, %p119
    %p121 = scmp.ne.s32.totalorder %s113, %s116
    %p122 = scmp.eq.s32.totalorder %s9, 0
    %p123 = por %p121, %p122
    %p124 = scmp.ne.s32.totalorder %s113, %s116
    %p125 = scmp.eq.s32.totalorder %s14, 1
    %p126 = por %p124, %p125
    %p127 = scmp.ne.s32.totalorder %s116, %s117
    %p128 = scmp.eq.s32.totalorder %s14, 0
    %p129 = por %p127, %p128
    %p130 = scmp.ne.s32.totalorder %s116, %s117
    %p131 = scmp.eq.s32.totalorder %s15, 1
    %p132 = por %p130, %p131
    %p134 = scmp.ne.s32.totalorder %s117, %s133
    %p135 = scmp.eq.s32.totalorder %s15, 0
    %p136 = por %p134, %p135
    %p137 = scmp.le.s32.totalorder 1, %s9
    %p138 = scmp.lt.s32.totalorder %s9, 3
    %p139 = pnand %p137, %p138
    %p140 = pneg %p139
    // Predicated region
    $region9: #{up_conv_forward.3} parent=5 // pred_check
      _
    $region10: #{up_conv_forward.3} parent=5 // pred_check_branch
      %142 = sbr.rel (%p139) target = $region12
    $region11: #{up_conv_forward.3} parent=5 // pred_region
      %s143 = ssub.s32 %s9, 1
    $region12: #{up_conv_forward.3} parent=5 // pred_fallthru
      _
    %p144 = scmp.lt.s32.totalorder %s9, 2
    // Predicated region
    $region13: #{up_conv_forward.3} parent=5 // pred_check
      %p145 = pneg %p144
    $region14: #{up_conv_forward.3} parent=5 // pred_check_branch
      %147 = sbr.rel (%p145) target = $region16
    $region15: #{up_conv_forward.3} parent=5 // pred_region
      // Predicated region
      $region17: #{up_conv_forward.3} parent=15 // pred_check
        %p148 = pneg %p43
      $region18: #{up_conv_forward.3} parent=15 // pred_check_branch
        %150 = sbr.rel (%p148) target = $region20
      $region19: #{up_conv_forward.3} parent=15 // pred_region
        %s151 = smul.u32 4, %s17
        %p152 = scmp.lt.s32.totalorder %s16, 1
        %s153 = scalar_select %p152, %s16, 1
        %p154 = scmp.lt.s32.totalorder %s151, 3
        %s155 = scalar_select %p154, %s151, 3
        %s156 = smul.addr %s153, 8
        %s157 = sadd.s32 %s155, %s156
        %s158 = smul.addr %s157, 8
        %s159 = scalar_lea.vmem %s0, %s158
        %s160 = smul.u32 4, %s17
      $region20: #{up_conv_forward.3} parent=15 // pred_fallthru
        _
      // Predicated region
      $region21: #{up_conv_forward.3} parent=15 // pred_check
        %p161 = pneg %p69
      $region22: #{up_conv_forward.3} parent=15 // pred_check_branch
        %163 = sbr.rel (%p161) target = $region24
      $region23: #{up_conv_forward.3} parent=15 // pred_region
        %p164 = scmp.lt.s32.totalorder %s16, 1
        %s165 = scalar_select %p164, %s16, 1
        %s166 = smul.addr %s165, 2
        %s167 = smul.addr %s166, 8
        %s168 = scalar_lea.vmem %s1, %s167
      $region24: #{up_conv_forward.3} parent=15 // pred_fallthru
        _
      // Predicated region
      $region25: #{up_conv_forward.3} parent=15 // pred_check
        %p169 = pneg %p95
      $region26: #{up_conv_forward.3} parent=15 // pred_check_branch
        %171 = sbr.rel (%p169) target = $region28
      $region27: #{up_conv_forward.3} parent=15 // pred_region
        %p172 = scmp.lt.s32.totalorder %s16, 1
        %s173 = scalar_select %p172, %s16, 1
        %s174 = smul.addr %s173, 2
        %s175 = smul.addr %s174, 8
        %s176 = scalar_lea.vmem %s2, %s175
      $region28: #{up_conv_forward.3} parent=15 // pred_fallthru
        _
    $region16: #{up_conv_forward.3} parent=5 // pred_fallthru
      _
    %p177 = scmp.le.s32.totalorder 1, %s9
    %p178 = scmp.lt.s32.totalorder %s9, 3
    %p179 = pnand %p177, %p178
    %p180 = pneg %p179
    // Predicated region
    $region29: #{up_conv_forward.3} parent=5 // pred_check
      _
    $region30: #{up_conv_forward.3} parent=5 // pred_check_branch
      %182 = sbr.rel (%p179) target = $region32
    $region31: #{up_conv_forward.3} parent=5 // pred_region
      %s183 = ssub.s32 %s9, 1
      %s184 = smul.u32 4, %s19
      %p185 = scmp.lt.s32.totalorder %s18, 1
      %s186 = scalar_select %p185, %s18, 1
      %p187 = scmp.lt.s32.totalorder %s184, 3
      %s188 = scalar_select %p187, %s184, 3
      %s189 = smul.addr %s186, 8
      %s190 = sadd.s32 %s188, %s189
      %s191 = smul.addr %s190, 8
      %s192 = scalar_lea.vmem %s0, %s191
      %p193 = pneg %p49
      %p194 = pneg %p46
      %p195 = scmp.lt.s32.totalorder %s18, 1
      %s196 = scalar_select %p195, %s18, 1
      %s197 = smul.addr %s196, 2
      %s198 = smul.addr %s197, 8
      %s199 = scalar_lea.vmem %s1, %s198
      %p200 = pneg %p75
      %p201 = pneg %p72
      %p202 = scmp.lt.s32.totalorder %s18, 1
      %s203 = scalar_select %p202, %s18, 1
      %s204 = smul.addr %s203, 2
      %s205 = smul.addr %s204, 8
      %s206 = scalar_lea.vmem %s2, %s205
      %p207 = pneg %p101
      %p208 = pneg %p98
      %p209 = pneg %p129
      %p210 = pneg %p126
      %s211 = smul.u32 4, %s19
      %p212 = scmp.lt.s32.totalorder %s18, 1
      %s213 = scalar_select %p212, %s18, 1
      %p214 = scmp.lt.s32.totalorder %s211, 3
      %s215 = scalar_select %p214, %s211, 3
      %s216 = smul.addr %s213, 8
      %s217 = sadd.s32 %s215, %s216
      %s218 = smul.addr %s217, 8
      %s219 = scalar_lea.vmem %s3, %s218
      %s220 = smul.u32 4, %s19
      %p221 = scmp.lt.s32.totalorder %s18, 1
      %s222 = scalar_select %p221, %s18, 1
      %p223 = scmp.lt.s32.totalorder %s220, 3
      %s224 = scalar_select %p223, %s220, 3
      %s225 = smul.addr %s222, 8
      %s226 = sadd.s32 %s224, %s225
      %s227 = smul.addr %s226, 8
      %s228 = scalar_lea.vmem %s0, %s227
      %s229 = smul.u32 4, %s19
      %p230 = scmp.lt.s32.totalorder %s18, 1
      %s231 = scalar_select %p230, %s18, 1
      %s232 = smul.addr %s231, 2
      %s233 = smul.addr %s232, 8
      %s234 = scalar_lea.vmem %s1, %s233
      %p235 = scmp.lt.s32.totalorder %s18, 1
      %s236 = scalar_select %p235, %s18, 1
      %s237 = smul.addr %s236, 2
      %s238 = smul.addr %s237, 8
      %s239 = scalar_lea.vmem %s2, %s238
      %s240 = smul.u32 4, %s19
      %p241 = scmp.lt.s32.totalorder %s18, 1
      %s242 = scalar_select %p241, %s18, 1
      %p243 = scmp.lt.s32.totalorder %s240, 3
      %s244 = scalar_select %p243, %s240, 3
      %s245 = smul.addr %s242, 8
      %s246 = sadd.s32 %s244, %s245
      %s247 = smul.addr %s246, 8
      %s248 = scalar_lea.vmem %s3, %s247
      %s249 = smul.u32 4, %s19
      %v250 = vld [vmem:[%s228] sm:$0xff]
      %v251 = vld [vmem:[%s228 + $0x8] sm:$0xff]
      %v252 = vld [vmem:[%s228 + $0x10] sm:$0xff]
      %v253 = vld [vmem:[%s228 + $0x18] sm:$0xff]
      %v254 = vld [vmem:[%s228 + $0x20] sm:$0xff]
      %v255 = vld [vmem:[%s228 + $0x28] sm:$0xff]
      %v256 = vld [vmem:[%s228 + $0x30] sm:$0xff]
      %v257 = vld [vmem:[%s228 + $0x38] sm:$0xff]
      %v258 = vld [vmem:[%s234] sm:$0xff]
      %v259 = vld [vmem:[%s234 + $0x8] sm:$0xff]
      %261 = vset.pattern.permute.xlu0 0
      %262 = vperm.xlu0 %261, %v258
      %v263 = vpop.permute.xlu0 %262
      %266 = vset.pattern.permute.xlu0 0
      %267 = vperm.xlu0 %266, %v259
      %v268 = vpop.permute.xlu0 %267
      %v270 = vsub.f32 %v250, %v263
      %v271 = vsub.f32 %v251, %v263
      %v272 = vsub.f32 %v252, %v263
      %v273 = vsub.f32 %v253, %v263
      %v274 = vsub.f32 %v254, %v268
      %v275 = vsub.f32 %v255, %v268
      %v276 = vsub.f32 %v256, %v268
      %v277 = vsub.f32 %v257, %v268
      %v278 = vld [vmem:[%s239] sm:$0xff]
      %v279 = vld [vmem:[%s239 + $0x8] sm:$0xff]
      %281 = vset.pattern.permute.xlu0 0
      %282 = vperm.xlu0 %281, %v278
      %v283 = vpop.permute.xlu0 %282
      %286 = vset.pattern.permute.xlu0 0
      %287 = vperm.xlu0 %286, %v279
      %v288 = vpop.permute.xlu0 %287
      %v290 = vmul.f32 %v270, %v283
      %v291 = vmul.f32 %v271, %v283
      %v292 = vmul.f32 %v272, %v283
      %v293 = vmul.f32 %v273, %v283
      %v294 = vmul.f32 %v274, %v288
      %v295 = vmul.f32 %v275, %v288
      %v296 = vmul.f32 %v276, %v288
      %v297 = vmul.f32 %v277, %v288
      %vm298 = vcmp.ge.f32.partialorder %v290, 0.0
      %vm299 = vcmp.ge.f32.partialorder %v291, 0.0
      %vm300 = vcmp.ge.f32.partialorder %v292, 0.0
      %vm301 = vcmp.ge.f32.partialorder %v293, 0.0
      %vm302 = vcmp.ge.f32.partialorder %v294, 0.0
      %vm303 = vcmp.ge.f32.partialorder %v295, 0.0
      %vm304 = vcmp.ge.f32.partialorder %v296, 0.0
      %vm305 = vcmp.ge.f32.partialorder %v297, 0.0
      %v306 = vmul.f32 %v290, 0.01
      %v307 = vmul.f32 %v291, 0.01
      %v308 = vmul.f32 %v292, 0.01
      %v309 = vmul.f32 %v293, 0.01
      %v310 = vmul.f32 %v294, 0.01
      %v311 = vmul.f32 %v295, 0.01
      %v312 = vmul.f32 %v296, 0.01
      %v313 = vmul.f32 %v297, 0.01
      %v314 = vsel %vm298, %v290, %v306
      %v315 = vsel %vm299, %v291, %v307
      %v316 = vsel %vm300, %v292, %v308
      %v317 = vsel %vm301, %v293, %v309
      %v318 = vsel %vm302, %v294, %v310
      %v319 = vsel %vm303, %v295, %v311
      %v320 = vsel %vm304, %v296, %v312
      %v321 = vsel %vm305, %v297, %v313
      %322 = vst [vmem:[%s248] sm:$0xff] %v314
      %323 = vst [vmem:[%s248 + $0x8] sm:$0xff] %v315
      %324 = vst [vmem:[%s248 + $0x10] sm:$0xff] %v316
      %325 = vst [vmem:[%s248 + $0x18] sm:$0xff] %v317
      %326 = vst [vmem:[%s248 + $0x20] sm:$0xff] %v318
      %327 = vst [vmem:[%s248 + $0x28] sm:$0xff] %v319
      %328 = vst [vmem:[%s248 + $0x30] sm:$0xff] %v320
      %329 = vst [vmem:[%s248 + $0x38] sm:$0xff] %v321
      %s330 = smul.u32 4, %s19
      %p331 = scmp.lt.s32.totalorder %s18, 1
      %s332 = scalar_select %p331, %s18, 1
      %p333 = scmp.lt.s32.totalorder %s330, 3
      %s334 = scalar_select %p333, %s330, 3
      %s335 = smul.addr %s332, 8
      %s336 = sadd.s32 %s334, %s335
      %s337 = smul.addr %s336, 8
      %s338 = scalar_lea.vmem %s3, %s337
      // Predicated region
      $region33: #{up_conv_forward.3} parent=31 // pred_check
        %p339 = pneg %p126
      $region34: #{up_conv_forward.3} parent=31 // pred_check_branch
        %341 = sbr.rel (%p339) target = $region36
      $region35: #{up_conv_forward.3} parent=31 // pred_region
        %s342 = smul.u32 4, %s19
      $region36: #{up_conv_forward.3} parent=31 // pred_fallthru
        _
    $region32: #{up_conv_forward.3} parent=5 // pred_fallthru
      _
    %p343 = scmp.le.s32.totalorder 2, %s9
    // Predicated region
    $region37: #{up_conv_forward.3} parent=5 // pred_check
      %p344 = pneg %p343
    $region38: #{up_conv_forward.3} parent=5 // pred_check_branch
      %346 = sbr.rel (%p344) target = $region40
    $region39: #{up_conv_forward.3} parent=5 // pred_region
      %s347 = ssub.s32 %s9, 2
      // Predicated region
      $region41: #{up_conv_forward.3} parent=39 // pred_check
        %p348 = pneg %p132
      $region42: #{up_conv_forward.3} parent=39 // pred_check_branch
        %350 = sbr.rel (%p348) target = $region44
      $region43: #{up_conv_forward.3} parent=39 // pred_region
        %s351 = smul.u32 4, %s21
        %p352 = scmp.lt.s32.totalorder %s20, 1
        %s353 = scalar_select %p352, %s20, 1
        %p354 = scmp.lt.s32.totalorder %s351, 3
        %s355 = scalar_select %p354, %s351, 3
        %s356 = smul.addr %s353, 8
        %s357 = sadd.s32 %s355, %s356
        %s358 = smul.addr %s357, 8
        %s359 = scalar_lea.vmem %s3, %s358
      $region44: #{up_conv_forward.3} parent=39 // pred_fallthru
        _
    $region40: #{up_conv_forward.3} parent=5 // pred_fallthru
      _
  $region6: #{up_conv_forward.3} parent=0 // loop_footer
    %s13 = sadd.s32 1, %s9
  $region7: #{up_conv_forward.3} parent=0 // loop_footer_branch
    %8 = sbr.rel target = $region3
  $region8: #{up_conv_forward.3} parent=0 // loop_exit
    _

</llo_original>
